<compile_context>
chip_gen: v5e
topology: v5e:2x2
jax: 0.10.0
libtpu: 0.0.40
codegen_flags: <defaults>
</compile_context>

<pallas_src>
import functools
import random

import numpy as np
import jax
import jax.numpy as jnp
from jax import lax
from jax.experimental import pallas as pl
from jax.experimental.pallas import tpu as pltpu


# ----------------------------------------------------------------------------
# Tiling helpers
# ----------------------------------------------------------------------------
_TARGET_BLOCK_BYTES = 6 * 1024 * 1024      # ~6 MiB tiles (review: 4-8 MiB)
_VMEM_LIMIT_BYTES = 48 * 1024 * 1024       # < v7x 64 MiB physical, < v5e/v6e 128 MiB


def _compiler_params(*sem):
    return pltpu.CompilerParams(dimension_semantics=tuple(sem),
                                vmem_limit_bytes=_VMEM_LIMIT_BYTES)


def _row_block(num_rows, row_len, itemsize, target_bytes=_TARGET_BLOCK_BYTES):
    """Largest sublane-aligned row block <= target_bytes.

    Keeps >= 2 grid steps when possible (so the 'parallel' grid axis can shard
    across v7x's two TensorCores) and rounds to 16 rows for 2-byte dtypes
    (bf16 packs two rows per sublane)."""
    mult = 16 if itemsize == 2 else 8
    rows = max(1, target_bytes // max(1, row_len * itemsize))
    rows = min(rows, num_rows)
    if num_rows >= 2 * mult:
        half = -(-((num_rows + 1) // 2) // mult) * mult
        rows = min(rows, half)
    if rows >= num_rows:
        return num_rows                         # full extent: always layout-legal
    return max(mult, (rows // mult) * mult)


def _lane_tile(length, per_col_bytes, target_bytes=_TARGET_BLOCK_BYTES):
    """Lane (last-dim) tile: full extent if it fits, else a multiple of 128."""
    if length * per_col_bytes <= target_bytes:
        return length
    return min(length, max(128, (target_bytes // per_col_bytes) // 128 * 128))


# ----------------------------------------------------------------------------
# Kernel 1: standalone BatchDrop hot path — lane-dense x * mask
# (only used when BatchDrop is called as a standalone module; the head fuses
#  the mask into its consumer kernels instead)
# ----------------------------------------------------------------------------
def _mask_mul_kernel(x_ref, m_ref, o_ref):
    o_ref[...] = x_ref[...] * m_ref[...]


@jax.jit
def _batch_drop_apply(x, mask_hw):
    N, C, H, W = x.shape
    R, L = N * C, H * W
    xr = x.reshape(R, L)
    mr = mask_hw.astype(x.dtype).reshape(1, L)
    tb = _row_block(R, L, x.dtype.itemsize)
    out = pl.pallas_call(
        _mask_mul_kernel,
        out_shape=jax.ShapeDtypeStruct((R, L), x.dtype),
        grid=(pl.cdiv(R, tb),),
        in_specs=[pl.BlockSpec((tb, L), lambda i: (i, 0)),
                  pl.BlockSpec((1, L), lambda i: (0, 0))],     # resident mask
        out_specs=pl.BlockSpec((tb, L), lambda i: (i, 0)),
        compiler_params=_compiler_params("parallel"),
    )(xr, mr)
    return out.reshape(N, C, H, W)


class BatchDrop:
    """Pallas-backed equivalent of the PyTorch BatchDrop module.

    The random rectangle coordinates come from host-side `random` exactly as
    in PyTorch; the resulting (H, W) mask is either applied standalone
    (__call__) or handed to the head, which fuses it into downstream kernels."""

    def __init__(self, h_ratio, w_ratio, seed=0):
        self.h_ratio = h_ratio
        self.w_ratio = w_ratio
        self.training = True
        self._rng = random.Random(seed)
        self.last_rects = []        # bookkeeping for reference checks

    def make_mask(self, h, w):
        a = self._rng.randint(0, 30)
        self.last_rects = []
        mask = np.ones((h, w), dtype=np.float32)
        if a > 15:
            return mask                         # PyTorch early-return: identity
        if self.training:
            rh = round(self.h_ratio * h)
            rw = round(self.w_ratio * w)
            for _ in range(a):
                sx = self._rng.randint(0, h - rh)
                sy = self._rng.randint(0, w - rw)
                mask[sx:sx + rh, sy:sy + rw] = 0.0
                self.last_rects.append((sx, rh, sy, rw))
        return mask

    def __call__(self, x):
        mask = self.make_mask(x.shape[-2], x.shape[-1])
        if not self.last_rects:
            return x               # all-ones mask == identity; skip the HBM pass
        return _batch_drop_apply(x, jnp.asarray(mask))


# ----------------------------------------------------------------------------
# Kernel 2: fused 1x1 conv (channel matmul) + BatchDrop masks + ReLU + residual
#   out[n] = x3[n]*m3 + relu( W @ (x4[n]*m4) )    (all in native NCHW)
# ----------------------------------------------------------------------------
def _conv1x1_mask_relu_add_kernel(x4_ref, m4_ref, x3_ref, m3_ref, w_ref, o_ref):
    # x4_ref: (1, C4, T)  m4_ref: (1, T)  x3_ref: (1, C3, T)  m3_ref: (1, T)
    # w_ref:  (C3, C4)    o_ref:  (1, C3, T)
    x4 = x4_ref[0].astype(jnp.float32) * m4_ref[...]          # mask fused (VPU)
    y = jnp.dot(w_ref[...], x4.astype(w_ref.dtype),           # MXU, f32 accum
                preferred_element_type=jnp.float32)
    res = x3_ref[0].astype(jnp.float32) * m3_ref[...]
    o_ref[0] = (res + jnp.maximum(y, 0.0)).astype(o_ref.dtype)


def conv1x1_mask_relu_add(x3v, x4v, m3, m4, w):
    """x3v (N,C3,HW) residual, x4v (N,C4,HW), masks (1,HW), w (C3,C4)."""
    N, C3, HW = x3v.shape
    C4 = x4v.shape[1]
    t_hw = _lane_tile(HW, (C4 + 2 * C3) * x3v.dtype.itemsize)
    return pl.pallas_call(
        _conv1x1_mask_relu_add_kernel,
        out_shape=jax.ShapeDtypeStruct((N, C3, HW), x3v.dtype),
        grid=(N, pl.cdiv(HW, t_hw)),
        in_specs=[pl.BlockSpec((1, C4, t_hw), lambda n, j: (n, 0, j)),
                  pl.BlockSpec((1, t_hw), lambda n, j: (0, j)),
                  pl.BlockSpec((1, C3, t_hw), lambda n, j: (n, 0, j)),
                  pl.BlockSpec((1, t_hw), lambda n, j: (0, j)),
                  # Resident weight (constant block index, fetched once).
                  # TODO(synk): on v7x, pipeline_mode=pl.Buffered(1) on this
                  # spec would avoid double-buffering the weight tile.
                  pl.BlockSpec((C3, C4), lambda n, j: (0, 0))],
        out_specs=pl.BlockSpec((1, C3, t_hw), lambda n, j: (n, 0, j)),
        compiler_params=_compiler_params("parallel", "parallel"),
    )(x4v, m4, x3v, m3, w)


# ----------------------------------------------------------------------------
# Kernel 3: GeM pooling with fused drop-mask and fused BN affine
#   o[r] = (mean_l clamp(x[r,l]*m[l], eps)^p)^(1/p) * scale[r] + shift[r]
# ----------------------------------------------------------------------------
def _gem_affine_kernel(x_ref, m_ref, s_ref, b_ref, o_ref, *, p, eps, inv_l):
    x = x_ref[...].astype(jnp.float32) * m_ref[...]
    xc = jnp.maximum(x, eps)
    if p == 3.0:
        xp = xc * xc * xc            # VPU-only: keeps the single-slot EUP free
    else:
        xp = jnp.exp(p * jnp.log(xc))
    mp = jnp.sum(xp, axis=-1, keepdims=True) * inv_l
    g = jnp.exp(jnp.log(mp) * (1.0 / p))          # tiny (tb,1) transcendental
    o_ref[...] = (g * s_ref[...] + b_ref[...]).astype(o_ref.dtype)


def gem_affine(xr, mask_row, scale_rows, shift_rows, *, p=3.0, eps=1e-6):
    """xr (R,L); mask_row (1,L); scale/shift (R,1) -> (R,1) float32."""
    R, L = xr.shape
    tb = _row_block(R, L, xr.dtype.itemsize)
    return pl.pallas_call(
        functools.partial(_gem_affine_kernel, p=float(p), eps=float(eps),
                          inv_l=1.0 / float(L)),
        out_shape=jax.ShapeDtypeStruct((R, 1), jnp.float32),
        grid=(pl.cdiv(R, tb),),
        in_specs=[pl.BlockSpec((tb, L), lambda i: (i, 0)),
                  pl.BlockSpec((1, L), lambda i: (0, 0)),       # resident mask
                  pl.BlockSpec((tb, 1), lambda i: (i, 0)),
                  pl.BlockSpec((tb, 1), lambda i: (i, 0))],
        out_specs=pl.BlockSpec((tb, 1), lambda i: (i, 0)),
        compiler_params=_compiler_params("parallel"),
    )(xr, mask_row, scale_rows, shift_rows)


@functools.partial(jax.jit, static_argnames=("p", "eps"))
def gem_pool(x, p=3.0, eps=1e-6):
    """Standalone GeM: (N, C, H, W) -> (N, C)."""
    N, C, H, W = x.shape
    R, L = N * C, H * W
    out = gem_affine(x.reshape(R, L), jnp.ones((1, L), x.dtype),
                     jnp.ones((R, 1), jnp.float32),
                     jnp.zeros((R, 1), jnp.float32), p=p, eps=eps)
    return out.reshape(N, C)


class GeM:
    def __init__(self, p=3.0, eps=1e-6):
        self.p = p
        self.eps = eps

    def __call__(self, x):
        return gem_pool(x, p=self.p, eps=self.eps)   # (N, C) == (N, C, 1, 1)


# ----------------------------------------------------------------------------
# The whole head forward under ONE jit
# ----------------------------------------------------------------------------
@functools.partial(jax.jit, static_argnames=("p", "eps", "bn_eps", "use_bf16",
                                             "neck", "neck_feat"))
def _head_forward(x3, x4, m3, m4, w5,
                  bn4_gamma, bn4_beta, bn4_mean, bn4_var,
                  bn3_gamma, bn3_beta, bn3_mean, bn3_var,
                  *, p, eps, bn_eps, use_bf16, neck, neck_feat):
    N, C3, H, W = x3.shape
    C4 = x4.shape[1]
    HW = H * W
    x3v = x3.reshape(N, C3, HW)                  # free NCHW views (contiguous)
    x4v = x4.reshape(N, C4, HW)
    m3r = m3.reshape(1, HW).astype(x3.dtype)
    m4r = m4.reshape(1, HW).astype(x4.dtype)

    if neck_feat != 'after':                     # return raw global_feat
        out = gem_affine(x4v.reshape(N * C4, HW), m4r,
                         jnp.ones((N * C4, 1), jnp.float32),
                         jnp.zeros((N * C4, 1), jnp.float32), p=p, eps=eps)
        return out.reshape(N, C4)

    # x = dropped(x3) + relu(conv5(dropped(x4))) — one fused NCHW kernel.
    w = w5.astype(jnp.bfloat16) if use_bf16 else w5
    xf = conv1x1_mask_relu_add(x3v, x4v, m3r, m4r, w)        # (N, C3, HW)

    # TODO(synk): sub_feat1/sub_feat2 (x[:,:,:10,:] / x[:,:,10:,:]) feed
    # bottleneck_sub1/sub2 + classifier_sub1/2 which are never defined in the
    # reference __init__; they are dead in eval mode and skipped here.

    # BN-neck folded to per-row scale/shift and fused into the GeM kernels.
    if neck == 'no':
        s4 = jnp.ones((C4,), jnp.float32)
        b4 = jnp.zeros((C4,), jnp.float32)
    else:
        s4 = bn4_gamma / jnp.sqrt(bn4_var + bn_eps)
        b4 = bn4_beta - bn4_mean * s4
    s3 = bn3_gamma / jnp.sqrt(bn3_var + bn_eps)
    b3 = bn3_beta - bn3_mean * s3

    feat = gem_affine(x4v.reshape(N * C4, HW), m4r,
                      jnp.tile(s4, N).reshape(N * C4, 1),
                      jnp.tile(b4, N).reshape(N * C4, 1),
                      p=p, eps=eps).reshape(N, C4)
    sub_bn3 = gem_affine(xf.reshape(N * C3, HW), jnp.ones((1, HW), xf.dtype),
                         jnp.tile(s3, N).reshape(N * C3, 1),
                         jnp.tile(b3, N).reshape(N * C3, 1),
                         p=p, eps=eps).reshape(N, C3)
    return jnp.concatenate([feat, sub_bn3], axis=1)


class BackboneFpnInferHead:
    """Backbone_fpn_infer head (eval, neck='bnneck', neck_feat='after').

    TODO(synk): the ResNet-family backbone (base.conv1/bn1/maxpool/layer1-4)
    is an external pretrained module that is not provided; this head consumes
    the layer3 / layer4 feature maps directly."""

    def __init__(self, c3, c4, key, seed=0):
        self.training = False
        self.neck = 'bnneck'
        self.neck_feat = 'after'
        self.p = 3.0
        self.eps = 1e-6
        self.bn_eps = 1e-5
        self.dropblack = BatchDrop(0.05, 0.05, seed=seed)
        self.dropblack.training = self.training
        self.gap = GeM()             # module-fidelity; forward uses fused path
        self.gap_sub3 = GeM()
        # bf16 MXU path only when the 1x1 conv is big enough to be compute
        # bound (ResNet-FPN sizes: C4~2048, C3~1024); small shapes stay f32.
        self.use_bf16_matmul = bool(c3 >= 512 and c4 >= 512)
        k = jax.random.split(key, 9)
        self.conv5_w = 0.05 * jax.random.normal(k[0], (c3, c4), jnp.float32)
        self.bn_gamma = 1.0 + 0.1 * jax.random.normal(k[1], (c4,), jnp.float32)
        self.bn_beta = 0.1 * jax.random.normal(k[2], (c4,), jnp.float32)
        self.bn_mean = 0.1 * jax.random.normal(k[3], (c4,), jnp.float32)
        self.bn_var = jax.random.uniform(k[4], (c4,), jnp.float32, 0.5, 1.5)
        self.bn3_gamma = 1.0 + 0.1 * jax.random.normal(k[5], (c3,), jnp.float32)
        self.bn3_beta = 0.1 * jax.random.normal(k[6], (c3,), jnp.float32)
        self.bn3_mean = 0.1 * jax.random.normal(k[7], (c3,), jnp.float32)
        self.bn3_var = jax.random.uniform(k[8], (c3,), jnp.float32, 0.5, 1.5)

    def forward_with_masks(self, x3_feat, x4_feat, m3, m4):
        return _head_forward(
            x3_feat, x4_feat,
            jnp.asarray(m3, jnp.float32), jnp.asarray(m4, jnp.float32),
            self.conv5_w,
            self.bn_gamma, self.bn_beta, self.bn_mean, self.bn_var,
            self.bn3_gamma, self.bn3_beta, self.bn3_mean, self.bn3_var,
            p=self.p, eps=self.eps, bn_eps=self.bn_eps,
            use_bf16=self.use_bf16_matmul,
            neck=self.neck, neck_feat=self.neck_feat)

    def __call__(self, x3_feat, x4_feat):
        H, W = x3_feat.shape[-2:]
        # Host-side BatchDrop randomness (mirrors the two dropblack calls on
        # the layer3 / layer4 features); the masks are fused into the consumer
        # kernels instead of running a standalone x*mask HBM pass.
        m3 = self.dropblack.make_mask(H, W)
        m4 = self.dropblack.make_mask(H, W)
        return self.forward_with_masks(x3_feat, x4_feat, m3, m4)


# ----------------------------------------------------------------------------
# Pure-JAX references
# ----------------------------------------------------------------------------
def _gem_ref(x, p=3.0, eps=1e-6):
    xc = jnp.maximum(x.astype(jnp.float32), eps)
    return jnp.mean(xc ** p, axis=(2, 3)) ** (1.0 / p)


def _bn_ref(v, gamma, beta, mean, var, eps=1e-5):
    return (v - mean) / jnp.sqrt(var + eps) * gamma + beta


def head_reference(x3f, x4, w5, bn4, bn3, m3=None, m4=None):
    if m3 is not None:
        x3f = x3f * jnp.asarray(m3)[None, None]
    if m4 is not None:
        x4 = x4 * jnp.asarray(m4)[None, None]
    y = jnp.einsum('nchw,oc->nohw', x4, w5, precision=lax.Precision.HIGHEST)
    x = x3f + jnp.maximum(y, 0.0)
    sub3 = _gem_ref(x)
    gfeat = _gem_ref(x4)
    feat = _bn_ref(gfeat, *bn4)
    sub_bn3 = _bn_ref(sub3, *bn3)
    return jnp.concatenate([feat, sub_bn3], axis=1)


if __name__ == "__main__":
    key = jax.random.PRNGKey(0)
    kx, k3, k4, kp = jax.random.split(key, 4)

    # --- 1. Standalone BatchDrop kernel (training path) vs numpy reference --
    seed = 0
    while not (1 <= random.Random(seed).randint(0, 30) <= 15):
        seed += 1
    x_bd = jax.random.normal(kx, (2, 4, 16, 16), dtype=jnp.float32)
    bd = BatchDrop(0.3, 0.3, seed=seed)
    bd.training = True
    out_bd = jax.block_until_ready(bd(x_bd))
    assert len(bd.last_rects) >= 1
    mask_ref = np.ones((2, 4, 16, 16), dtype=np.float32)
    for sx, rh, sy, rw in bd.last_rects:
        mask_ref[:, :, sx:sx + rh, sy:sy + rw] = 0.0
    np.testing.assert_allclose(np.asarray(out_bd),
                               np.asarray(x_bd) * mask_ref, rtol=0, atol=0)

    # Eval mode: identity, no kernel launch.
    bd_eval = BatchDrop(0.3, 0.3, seed=seed)
    bd_eval.training = False
    assert bd_eval(x_bd) is x_bd

    # --- 2. Standalone GeM kernel vs reference ------------------------------
    out_gem = jax.block_until_ready(GeM()(x_bd))
    np.testing.assert_allclose(np.asarray(out_gem), np.asarray(_gem_ref(x_bd)),
                               rtol=2e-3, atol=2e-3)

    # --- 3. Backbone_fpn_infer head (eval) vs pure-JAX reference ------------
    N, C3, C4, H, W = 2, 32, 64, 16, 16
    x3f = jax.random.normal(k3, (N, C3, H, W), dtype=jnp.float32)
    x4f = jax.random.normal(k4, (N, C4, H, W), dtype=jnp.float32)
    head = BackboneFpnInferHead(C3, C4, kp, seed=123)
    out_head = jax.block_until_ready(head(x3f, x4f))
    bn4 = (head.bn_gamma, head.bn_beta, head.bn_mean, head.bn_var)
    bn3 = (head.bn3_gamma, head.bn3_beta, head.bn3_mean, head.bn3_var)
    ref_head = head_reference(x3f, x4f, head.conv5_w, bn4, bn3)
    np.testing.assert_allclose(np.asarray(out_head), np.asarray(ref_head),
                               rtol=2e-3, atol=2e-3)

    # --- 4. Fused drop-mask path inside the head (non-trivial masks) --------
    m3_np = np.ones((H, W), dtype=np.float32); m3_np[2:5, 3:7] = 0.0
    m4_np = np.ones((H, W), dtype=np.float32); m4_np[0:3, 10:14] = 0.0
    out_m = jax.block_until_ready(
        head.forward_with_masks(x3f, x4f, m3_np, m4_np))
    ref_m = head_reference(x3f, x4f, head.conv5_w, bn4, bn3, m3_np, m4_np)
    np.testing.assert_allclose(np.asarray(out_m), np.asarray(ref_m),
                               rtol=2e-3, atol=2e-3)

    print("KERNEL_OK")
</pallas_src>

<mosaic_0001>
module attributes {stable_mosaic.version = 11 : i64} {
  func.func @_mask_mul_kernel(%arg0: i32, %arg1: memref<8x256xf32, #tpu.memory_space<vmem>>, %arg2: memref<1x256xf32, #tpu.memory_space<vmem>>, %arg3: memref<8x256xf32, #tpu.memory_space<vmem>>) attributes {dimension_semantics = [#tpu.dimension_semantics<parallel>], iteration_bounds = array<i64: 1>, scalar_prefetch = 0 : i64, scratch_operands = 0 : i64, tpu.core_type = #tpu.core_type<tc>, window_params = [{transform_indices = @transform_0, window_bounds = array<i64: 8, 256>}, {pipeline_mode = #tpu.pipeline_mode<synchronous>, transform_indices = @transform_1, window_bounds = array<i64: 1, 256>}, {transform_indices = @transform_2, window_bounds = array<i64: 8, 256>}]} {
    %c0 = arith.constant 0 : index
    %c0_0 = arith.constant 0 : index
    %0 = vector.load %arg1[%c0, %c0_0] : memref<8x256xf32, #tpu.memory_space<vmem>>, vector<8x256xf32>
    %c0_1 = arith.constant 0 : index
    %c0_2 = arith.constant 0 : index
    %1 = vector.load %arg2[%c0_1, %c0_2] : memref<1x256xf32, #tpu.memory_space<vmem>>, vector<1x256xf32>
    %2 = vector.broadcast %1 : vector<1x256xf32> to vector<8x256xf32>
    %3 = arith.mulf %0, %2 : vector<8x256xf32>
    %c0_3 = arith.constant 0 : index
    %c0_4 = arith.constant 0 : index
    %4 = vector.load %arg3[%c0_3, %c0_4] : memref<8x256xf32, #tpu.memory_space<vmem>>, vector<8x256xf32>
    tpu.vector_store %arg3[%c0_3, %c0_4], %3 {strides = array<i32>} : memref<8x256xf32, #tpu.memory_space<vmem>>, vector<8x256xf32>,
    return
  }
  func.func @transform_0(%arg0: i32) -> (i32, i32) {
    %c0_i32 = arith.constant 0 : i32
    %c0_i32_0 = arith.constant 0 : i32
    return %arg0, %c0_i32 : i32, i32
  }
  func.func @transform_1(%arg0: i32) -> (i32, i32) {
    %c0_i32 = arith.constant 0 : i32
    %c0_i32_0 = arith.constant 0 : i32
    %c0_i32_1 = arith.constant 0 : i32
    return %c0_i32, %c0_i32_0 : i32, i32
  }
  func.func @transform_2(%arg0: i32) -> (i32, i32) {
    %c0_i32 = arith.constant 0 : i32
    %c0_i32_0 = arith.constant 0 : i32
    return %arg0, %c0_i32 : i32, i32
  }
}

</mosaic_0001>

<llo_original>
// kernel: _batch_drop_apply.1
$region0: #{_batch_drop_apply.1}
  #allocation0 [shape = 'u32[]', space=smem, size = 0x4, offset = 0x4, fixed_abs, tag = 'smem constant byte address 0x4 - core index']
  #allocation1 [shape = 'u32[72,128]{1,0:T(1,128)}', space=vmem, size = 0x9000, scoped, tag = 'internal scratch']
  %s0 = inlined_call_operand.vmem [shape: f32[8,256], index: 0, kind: input, shape index: {}]
  %s1 = inlined_call_operand.vmem [shape: f32[1,256], index: 1, kind: input, shape index: {}]
  %s2 = inlined_call_operand.vmem [shape: f32[8,256], index: 2, kind: output, shape index: {}]
  %s3 = sld [smem:[#allocation0]]
  $region18: #{_batch_drop_apply.1} parent=0
    _
  %s5 = ssub.s32 1, %s3
  %s6 = scalar_select 0, %s5, %s3
  // Predicated region
  $region2: #{_batch_drop_apply.1} parent=0 // pred_check
    _
  $region3: #{_batch_drop_apply.1} parent=0 // pred_check_branch
    %8 = sbr.rel (0) target = $region5
  $region4: #{_batch_drop_apply.1} parent=0 // pred_region
    _
  $region5: #{_batch_drop_apply.1} parent=0 // pred_fallthru
    _
  // Predicated region
  $region6: #{_batch_drop_apply.1} parent=0 // pred_check
    _
  $region7: #{_batch_drop_apply.1} parent=0 // pred_check_branch
    %10 = sbr.rel (0) target = $region9
  $region8: #{_batch_drop_apply.1} parent=0 // pred_region
    _
  $region9: #{_batch_drop_apply.1} parent=0 // pred_fallthru
    _
  %v11 = vld [vmem:[%s0] sm:$0xff]
  %v12 = vld [vmem:[%s0 + $0x8] sm:$0xff]
  %v13 = vld [vmem:[%s1] sm:$0x3]
  %v15 = vperm.slane %v13, 0
  %v16 = vperm.slane %v13, 1
  %v19 = vmul.f32 %v11, %v15
  %v20 = vmul.f32 %v12, %v16
  %21 = vst [vmem:[%s2] sm:$0xff] %v19
  %22 = vst [vmem:[%s2 + $0x8] sm:$0xff] %v20
  // Predicated region
  $region10: #{_batch_drop_apply.1} parent=0 // pred_check
    _
  $region11: #{_batch_drop_apply.1} parent=0 // pred_check_branch
    %24 = sbr.rel (0) target = $region13
  $region12: #{_batch_drop_apply.1} parent=0 // pred_region
    _
  $region13: #{_batch_drop_apply.1} parent=0 // pred_fallthru
    _
  // Predicated region
  $region14: #{_batch_drop_apply.1} parent=0 // pred_check
    _
  $region15: #{_batch_drop_apply.1} parent=0 // pred_check_branch
    %26 = sbr.rel (0) target = $region17
  $region16: #{_batch_drop_apply.1} parent=0 // pred_region
    _
  $region17: #{_batch_drop_apply.1} parent=0 // pred_fallthru
    _

</llo_original>
